<compile_context>
chip_gen: v7x
topology: tpu7x:2x2x1
jax: 0.10.0
libtpu: 0.0.40
codegen_flags: <defaults>
</compile_context>

<pallas_src>
import jax
import jax.numpy as jnp
from jax.experimental import pallas as pl
from jax.experimental.pallas import tpu as pltpu


def _round_up(x: int, m: int) -> int:
    return ((x + m - 1) // m) * m


def _logreg_kernel(x_ref, wt_ref, b_ref, o_ref):
    # x_ref: (TILE_B, D_in), wt_ref: (D_in, D_out), b_ref: (1, D_out),
    # o_ref: (TILE_B, D_out)
    logits = jnp.dot(x_ref[...], wt_ref[...], preferred_element_type=jnp.float32)
    logits = logits + b_ref[...]                       # broadcast (1, D_out)
    # Exact, overflow-free sigmoid using a single EUP transcendental (tanh);
    # the mul/add ride the VPU.
    sig = 0.5 * jnp.tanh(0.5 * logits) + 0.5
    o_ref[...] = sig.astype(o_ref.dtype)


def prepare_params(weight, bias, dtype=jnp.float32):
    """One-time (init-time) param prep, outside the per-call hot path.

    weight: (D_out, D_in) PyTorch Linear layout; bias: (D_out,).
    Returns (W^T of shape (D_in, D_out), bias of shape (1, D_out)).
    """
    wt = jnp.asarray(weight, dtype).T           # (D_in, D_out)
    b_row = jnp.asarray(bias, dtype).reshape(1, -1)
    return wt, b_row


def _vmem_limit_bytes() -> int:
    """Per-generation scoped-VMEM limit: 3/4 of physical, capped at 64 MiB."""
    cap = 128 << 20
    try:
        info_cap = pltpu.get_tpu_info().vmem_capacity_bytes
        if info_cap:
            cap = int(info_cap)
    except Exception:
        pass
    return int(min(64 << 20, (cap * 3) // 4))


def _pick_tile_b(batch, d_in, d_out, x_bytes, w_bytes, o_bytes, vmem_limit):
    """Largest multiple-of-8 batch tile whose pipelined VMEM footprint fits.

    Budget = vmem_limit - resident(W^T, bias) - headroom; streamed x/out tiles
    are double-buffered by the Pallas pipeline, so they count 2x.
    """
    d_in_l = _round_up(d_in, 128)    # VMEM lane padding of x's last dim
    d_out_l = _round_up(d_out, 128)  # VMEM lane padding of W^T / out last dim
    resident = 2 * w_bytes * (_round_up(d_in, 8) * d_out_l + 8 * d_out_l)
    budget = max(vmem_limit - resident - (2 << 20), 0)
    per_row = 2 * (x_bytes * d_in_l + o_bytes * d_out_l)
    max_tile = budget // max(per_row, 1)
    tile = min(max_tile, 1024, _round_up(batch, 8))
    return max(8, (tile // 8) * 8)


@jax.jit
def logistic_regression_forward(x, wt, bias_row):
    """x: (B, D_in); wt: (D_in, D_out); bias_row: (1, D_out).

    Returns sigmoid(x @ wt + bias) of shape (B, D_out), dtype of x.
    """
    B, d_in = x.shape
    d_out = wt.shape[1]
    out_dtype = x.dtype

    vmem_limit = _vmem_limit_bytes()
    tile_b = _pick_tile_b(
        B, d_in, d_out,
        jnp.dtype(x.dtype).itemsize, jnp.dtype(wt.dtype).itemsize,
        jnp.dtype(out_dtype).itemsize, vmem_limit)
    n_tiles = pl.cdiv(B, tile_b)   # ragged last tile is masked by Pallas

    cost = pl.CostEstimate(
        flops=2 * B * d_in * d_out,
        transcendentals=B * d_out,
        bytes_accessed=(jnp.dtype(x.dtype).itemsize * B * d_in
                        + jnp.dtype(wt.dtype).itemsize * d_in * d_out
                        + jnp.dtype(out_dtype).itemsize * B * d_out),
    )

    return pl.pallas_call(
        _logreg_kernel,
        out_shape=jax.ShapeDtypeStruct((B, d_out), out_dtype),
        grid_spec=pltpu.PrefetchScalarGridSpec(
            num_scalar_prefetch=0,
            grid=(n_tiles,),
            in_specs=[
                pl.BlockSpec((tile_b, d_in), lambda i: (i, 0)),  # streamed x tiles
                pl.BlockSpec((d_in, d_out), lambda i: (0, 0)),   # resident W^T
                pl.BlockSpec((1, d_out), lambda i: (0, 0)),      # resident bias
            ],
            out_specs=pl.BlockSpec((tile_b, d_out), lambda i: (i, 0)),
        ),
        compiler_params=pltpu.CompilerParams(
            dimension_semantics=("parallel",),   # megacore sharding on v7x
            vmem_limit_bytes=vmem_limit,
        ),
        cost_estimate=cost,
    )(x, wt, bias_row)


def _ref_forward(x, weight, bias):
    return jax.nn.sigmoid(x @ weight.T + bias)


if __name__ == "__main__":
    key = jax.random.PRNGKey(0)
    kx, kw, kb = jax.random.split(key, 3)

    B, D_in, D_out = 8, 32, 16
    x = jax.random.normal(kx, (B, D_in), dtype=jnp.float32)
    # Deterministic "Kaiming-uniform-like" init, synthetic (no checkpoint load).
    bound = 1.0 / (D_in ** 0.5)
    weight = jax.random.uniform(kw, (D_out, D_in), minval=-bound, maxval=bound,
                                dtype=jnp.float32)
    bias = jax.random.uniform(kb, (D_out,), minval=-bound, maxval=bound,
                              dtype=jnp.float32)

    # One-time param prep (transpose) outside the hot path.
    wt, b_row = prepare_params(weight, bias)

    out = logistic_regression_forward(x, wt, b_row)
    out = jax.block_until_ready(out)

    ref = _ref_forward(x, weight, bias)
    assert out.shape == (B, D_out)
    err = float(jnp.max(jnp.abs(out - ref)))
    assert err < 1e-5, f"max abs err {err}"
    print("KERNEL_OK")
</pallas_src>

<mosaic_0001>
module attributes {stable_mosaic.version = 11 : i64} {
  func.func @_logreg_kernel(%arg0: i32, %arg1: memref<8x32xf32, #tpu.memory_space<vmem>>, %arg2: memref<32x16xf32, #tpu.memory_space<vmem>>, %arg3: memref<1x16xf32, #tpu.memory_space<vmem>>, %arg4: memref<8x16xf32, #tpu.memory_space<vmem>>) attributes {dimension_semantics = [#tpu.dimension_semantics<parallel>], iteration_bounds = array<i64: 1>, scalar_prefetch = 0 : i64, scratch_operands = 0 : i64, tpu.core_type = #tpu.core_type<tc>, window_params = [{transform_indices = @transform_0, window_bounds = array<i64: 8, 32>}, {pipeline_mode = #tpu.pipeline_mode<synchronous>, transform_indices = @transform_1, window_bounds = array<i64: 32, 16>}, {pipeline_mode = #tpu.pipeline_mode<synchronous>, transform_indices = @transform_2, window_bounds = array<i64: 1, 16>}, {transform_indices = @transform_3, window_bounds = array<i64: 8, 16>}]} {
    %c0 = arith.constant 0 : index
    %c0_0 = arith.constant 0 : index
    %0 = vector.load %arg1[%c0, %c0_0] : memref<8x32xf32, #tpu.memory_space<vmem>>, vector<8x32xf32>
    %c0_1 = arith.constant 0 : index
    %c0_2 = arith.constant 0 : index
    %1 = vector.load %arg2[%c0_1, %c0_2] : memref<32x16xf32, #tpu.memory_space<vmem>>, vector<32x16xf32>
    %cst = arith.constant dense<0.000000e+00> : vector<8x16xf32>
    %2 = tpu.matmul %0, %1, %cst {dimension_numbers = #tpu.dot_dimension_numbers<[1], [0], [0], [1], [0, 0, 1, 1], [], []>} : vector<8x32xf32>, vector<32x16xf32>, vector<8x16xf32> -> vector<8x16xf32>
    %c0_3 = arith.constant 0 : index
    %c0_4 = arith.constant 0 : index
    %3 = vector.load %arg3[%c0_3, %c0_4] : memref<1x16xf32, #tpu.memory_space<vmem>>, vector<1x16xf32>
    %4 = vector.broadcast %3 : vector<1x16xf32> to vector<8x16xf32>
    %5 = arith.addf %2, %4 : vector<8x16xf32>
    %cst_5 = arith.constant 5.000000e-01 : f32
    %6 = vector.broadcast %cst_5 : f32 to vector<8x16xf32>
    %7 = arith.mulf %6, %5 : vector<8x16xf32>
    %8 = math.tanh %7 : vector<8x16xf32>
    %cst_6 = arith.constant 5.000000e-01 : f32
    %9 = vector.broadcast %cst_6 : f32 to vector<8x16xf32>
    %10 = arith.mulf %9, %8 : vector<8x16xf32>
    %cst_7 = arith.constant 5.000000e-01 : f32
    %11 = vector.broadcast %cst_7 : f32 to vector<8x16xf32>
    %12 = arith.addf %10, %11 : vector<8x16xf32>
    %c0_8 = arith.constant 0 : index
    %c0_9 = arith.constant 0 : index
    %13 = vector.load %arg4[%c0_8, %c0_9] : memref<8x16xf32, #tpu.memory_space<vmem>>, vector<8x16xf32>
    tpu.vector_store %arg4[%c0_8, %c0_9], %12 {strides = array<i32>} : memref<8x16xf32, #tpu.memory_space<vmem>>, vector<8x16xf32>,
    return
  }
  func.func @transform_0(%arg0: i32) -> (i32, i32) {
    %c0_i32 = arith.constant 0 : i32
    %c0_i32_0 = arith.constant 0 : i32
    return %arg0, %c0_i32 : i32, i32
  }
  func.func @transform_1(%arg0: i32) -> (i32, i32) {
    %c0_i32 = arith.constant 0 : i32
    %c0_i32_0 = arith.constant 0 : i32
    %c0_i32_1 = arith.constant 0 : i32
    return %c0_i32, %c0_i32_0 : i32, i32
  }
  func.func @transform_2(%arg0: i32) -> (i32, i32) {
    %c0_i32 = arith.constant 0 : i32
    %c0_i32_0 = arith.constant 0 : i32
    %c0_i32_1 = arith.constant 0 : i32
    return %c0_i32, %c0_i32_0 : i32, i32
  }
  func.func @transform_3(%arg0: i32) -> (i32, i32) {
    %c0_i32 = arith.constant 0 : i32
    %c0_i32_0 = arith.constant 0 : i32
    return %arg0, %c0_i32 : i32, i32
  }
}

</mosaic_0001>

<llo_original>
// kernel: logistic_regression_forward.1
$region0: #{logistic_regression_forward.1}
  #allocation0 [shape = 'u32[]', space=smem, size = 0x4, offset = 0x4, fixed_abs, tag = 'smem constant byte address 0x4 - core index']
  #allocation1 [shape = 'u32[144,128]{1,0:T(1,128)}', space=vmem, size = 0x12000, scoped, tag = 'internal scratch']
  %s0 = inlined_call_operand.hbm [shape: f32[8,32], index: 0, kind: input, shape index: {}]
  %s1 = inlined_call_operand.hbm [shape: f32[32,16], index: 1, kind: input, shape index: {}]
  %s2 = inlined_call_operand.hbm [shape: f32[1,16], index: 2, kind: input, shape index: {}]
  %s3 = inlined_call_operand.hbm [shape: f32[8,16], index: 3, kind: output, shape index: {}]
  %s4 = sld [smem:[#allocation0]]
  $region34: #{logistic_regression_forward.1} parent=0
    _
  %s6 = ssub.s32 1, %s4
  %s7 = scalar_select 0, %s6, %s4
  $region1: #{logistic_regression_forward.1} parent=0
    #allocation2 [shape = 'u8[4096]{0}', space=vmem, size = 0x1000, scoped, tag = 'input window, operand 0, single buffered']
    #allocation3 [shape = 's32[1]{0}', space=sflag, size = 0x4, scoped, tag = 'scoped memory for logistic_regression_forward.1']
    #allocation4 [shape = 's32[1]{0}', space=sflag, size = 0x4, scoped, tag = 'scoped memory for logistic_regression_forward.1']
    #allocation5 [shape = 'u8[16384]{0}', space=vmem, size = 0x4000, scoped, tag = 'input window, operand 1, single buffered']
    #allocation6 [shape = 's32[1]{0}', space=sflag, size = 0x4, scoped, tag = 'scoped memory for logistic_regression_forward.1']
    #allocation7 [shape = 'u8[512]{0}', space=vmem, size = 0x400, scoped, tag = 'input window, operand 2, single buffered']
    #allocation8 [shape = 'u8[4096]{0}', space=vmem, size = 0x1000, scoped, tag = 'output window, operand 0, single buffered']
    %8 = vsyncpa [#allocation3], 0
    %9 = vsyncpa [#allocation6], 0
    %10 = vsyncpa [#allocation4], 0
    // Predicated region
    $region2: #{logistic_regression_forward.1} parent=1 // pred_check
      _
    $region3: #{logistic_regression_forward.1} parent=1 // pred_check_branch
      %12 = sbr.rel (0) target = $region5
    $region4: #{logistic_regression_forward.1} parent=1 // pred_region
      %s14 = ssub.s32 128, 128
      %15 = vsyncadd [#allocation3], %s14
      %s17 = sshll.u32 [#allocation2], 4
      %s18 = int_to_ptr.vmem [resolvable:$true] %s17
      %20 = dma.hbm_to_vmem [thread:$0]  %s0, 128, %s18, [#allocation3]
    $region5: #{logistic_regression_forward.1} parent=1 // pred_fallthru
      _
    // Predicated region
    $region6: #{logistic_regression_forward.1} parent=1 // pred_check
      _
    $region7: #{logistic_regression_forward.1} parent=1 // pred_check_branch
      %22 = sbr.rel (0) target = $region9
    $region8: #{logistic_regression_forward.1} parent=1 // pred_region
      %s24 = ssub.s32 512, 512
      %25 = vsyncadd [#allocation6], %s24
      %s26 = sshll.u32 [#allocation5], 4
      %s27 = int_to_ptr.vmem [resolvable:$true] %s26
      %32 = dma.hbm_to_vmem [thread:$0]  %s1, 512, %s27, [#allocation6], 128, 128, 8
    $region9: #{logistic_regression_forward.1} parent=1 // pred_fallthru
      _
    // Predicated region
    $region10: #{logistic_regression_forward.1} parent=1 // pred_check
      _
    $region11: #{logistic_regression_forward.1} parent=1 // pred_check_branch
      %34 = sbr.rel (0) target = $region13
    $region12: #{logistic_regression_forward.1} parent=1 // pred_region
      %s36 = ssub.s32 16, 16
      %37 = vsyncadd [#allocation6], %s36
      %s39 = sshll.u32 [#allocation7], 4
      %s40 = int_to_ptr.vmem [resolvable:$true] %s39
      %42 = dma.hbm_to_vmem [thread:$0]  %s2, 16, %s40, [#allocation6]
    $region13: #{logistic_regression_forward.1} parent=1 // pred_fallthru
      _
    // Predicated region
    $region14: #{logistic_regression_forward.1} parent=1 // pred_check
      _
    $region15: #{logistic_regression_forward.1} parent=1 // pred_check_branch
      %44 = sbr.rel (0) target = $region17
    $region16: #{logistic_regression_forward.1} parent=1 // pred_region
      %45 = dma.done [#allocation3], 128
    $region17: #{logistic_regression_forward.1} parent=1 // pred_fallthru
      _
    // Predicated region
    $region18: #{logistic_regression_forward.1} parent=1 // pred_check
      _
    $region19: #{logistic_regression_forward.1} parent=1 // pred_check_branch
      %47 = sbr.rel (0) target = $region21
    $region20: #{logistic_regression_forward.1} parent=1 // pred_region
      %48 = dma.done [#allocation6], 512
    $region21: #{logistic_regression_forward.1} parent=1 // pred_fallthru
      _
    // Predicated region
    $region22: #{logistic_regression_forward.1} parent=1 // pred_check
      _
    $region23: #{logistic_regression_forward.1} parent=1 // pred_check_branch
      %50 = sbr.rel (0) target = $region25
    $region24: #{logistic_regression_forward.1} parent=1 // pred_region
      %51 = dma.done [#allocation6], 16
    $region25: #{logistic_regression_forward.1} parent=1 // pred_fallthru
      _
    %v52 = vld [vmem:[#allocation2] sm:$0xff]
    %v53 = vld [vmem:[#allocation5] sm:$0xff]
    %v54 = vld [vmem:[#allocation5 + $0x8] sm:$0xff]
    %v55 = vld [vmem:[#allocation5 + $0x10] sm:$0xff]
    %v56 = vld [vmem:[#allocation5 + $0x18] sm:$0xff]
    %v57 = vld [vmem:[#allocation7] sm:$0x1]
    %v59 = vlaneseq
    %v60 = vshrl.u32 %v59, 7
    %v61 = vsub.s32 0, %v60
    %v62 = vrot.slane %v57, %v61
    %vm64 = vcmask 261120
    %v66 = vsel %vm64, %v52, 0
    %68 = vmatprep.subr.mxu0 0.0
    %69 = vmatpush1.msra.mxu0 %v53
    %70 = vmatprep.subr.mxu0 0.0
    %71 = vmatpush1.msra.mxu0 %v54
    %72 = vmatprep.subr.mxu0 0.0
    %73 = vmatpush1.msra.mxu0 %v55
    %74 = vmatprep.subr.mxu0 0.0
    %75 = vmatpush1.msra.mxu0 %v56
    %76 = vmatprep.subr.mxu0 0.0
    %77 = vmatpush1.msra.mxu0 0.0
    %78 = vmatprep.subr.mxu0 0.0
    %79 = vmatpush1.msra.mxu0 0.0
    %80 = vmatprep.subr.mxu0 0.0
    %81 = vmatpush1.msra.mxu0 0.0
    %82 = vmatprep.subr.mxu0 0.0
    %83 = vmatpush1.msra.mxu0 0.0
    %84 = vmatprep.subr.mxu0 0.0
    %85 = vmatpush1.msra.mxu0 0.0
    %86 = vmatprep.subr.mxu0 0.0
    %87 = vmatpush1.msra.mxu0 0.0
    %88 = vmatprep.subr.mxu0 0.0
    %89 = vmatpush1.msra.mxu0 0.0
    %90 = vmatprep.subr.mxu0 0.0
    %91 = vmatpush1.msra.mxu0 0.0
    %92 = vmatprep.subr.mxu0 0.0
    %93 = vmatpush1.msra.mxu0 0.0
    %94 = vmatprep.subr.mxu0 0.0
    %95 = vmatpush1.msra.mxu0 0.0
    %96 = vmatprep.subr.mxu0 0.0
    %97 = vmatpush1.msra.mxu0 0.0
    %98 = vmatprep.subr.mxu0 0.0
    %99 = vmatpush1.msra.mxu0 0.0
    %100 = vmatprep.subr.mxu0 0.0
    %101 = vmatpush1.msra.mxu0 0.0
    %102 = vmatprep.subr.mxu0 0.0
    %103 = vmatpush1.msra.mxu0 0.0
    %104 = vmatprep.subr.mxu0 0.0
    %105 = vmatpush1.msra.mxu0 0.0
    %106 = vmatprep.subr.mxu0 0.0
    %107 = vmatpush1.msra.mxu0 0.0
    %108 = vmatprep.subr.mxu0 0.0
    %109 = vmatpush1.msra.mxu0 0.0
    %110 = vmatprep.subr.mxu0 0.0
    %111 = vmatpush1.msra.mxu0 0.0
    %112 = vmatprep.subr.mxu0 0.0
    %113 = vmatpush1.msra.mxu0 0.0
    %114 = vmatprep.subr.mxu0 0.0
    %115 = vmatpush1.msra.mxu0 0.0
    %116 = vmatprep.subr.mxu0 0.0
    %117 = vmatpush1.msra.mxu0 0.0
    %118 = vmatprep.subr.mxu0 0.0
    %119 = vmatpush1.msra.mxu0 0.0
    %120 = vmatprep.subr.mxu0 0.0
    %121 = vmatpush1.msra.mxu0 0.0
    %122 = vmatprep.subr.mxu0 0.0
    %123 = vmatpush1.msra.mxu0 0.0
    %124 = vmatprep.subr.mxu0 0.0
    %125 = vmatpush1.msra.mxu0 0.0
    %126 = vmatprep.subr.mxu0 0.0
    %127 = vmatpush1.msra.mxu0 0.0
    %128 = vmatprep.subr.mxu0 0.0
    %129 = vmatpush1.msra.mxu0 0.0
    %130 = vmatprep.subr.mxu0 0.0
    %131 = vmatpush1.msra.mxu0 0.0
    %132 = vmatprep.mubr.f32.mxu0 0.0
    %133 = vmatmul.mubr.f32.gmra.mrb[0].mxu0 %v66
    %v134 = vpop.f32.mrb[0].mxu0
    %v135 = vadd.f32 %v62, %v134
    %v136 = vpop.f32.mrb[0].mxu0
    %137 = vdwg.mxu0
    %v138 = vmul.f32 %v135, 0.5
    %v139 = vtanh.pop %v138
    %v140 = vmul.f32 %v139, 0.5
    %v141 = vadd.f32 %v140, 0.5
    %vm142 = vcmask 130048
    %143 = vst.msk [vmem:[#allocation8] sm:$0xff] %vm142, %v141
    // Predicated region
    $region26: #{logistic_regression_forward.1} parent=1 // pred_check
      _
    $region27: #{logistic_regression_forward.1} parent=1 // pred_check_branch
      %145 = sbr.rel (0) target = $region29
    $region28: #{logistic_regression_forward.1} parent=1 // pred_region
      %s147 = ssub.s32 128, 128
      %148 = vsyncadd [#allocation4], %s147
      %s150 = sshll.u32 [#allocation8], 4
      %s151 = int_to_ptr.vmem [resolvable:$true] %s150
      %153 = dma.vmem_to_hbm [thread:$0]  %s151, 128, %s3, [#allocation4]
    $region29: #{logistic_regression_forward.1} parent=1 // pred_fallthru
      _
    // Predicated region
    $region30: #{logistic_regression_forward.1} parent=1 // pred_check
      _
    $region31: #{logistic_regression_forward.1} parent=1 // pred_check_branch
      %155 = sbr.rel (0) target = $region33
    $region32: #{logistic_regression_forward.1} parent=1 // pred_region
      %156 = dma.done [#allocation4], 128
    $region33: #{logistic_regression_forward.1} parent=1 // pred_fallthru
      _
    %157 = vsyncpa [#allocation3], 1
    %158 = vsyncpa [#allocation6], 1
    %159 = vsyncpa [#allocation4], 1

</llo_original>
